<compile_context>
chip_gen: v7x
topology: tpu7x:2x2x1
jax: 0.10.0
libtpu: 0.0.40
codegen_flags: <defaults>
</compile_context>

<pallas_src>
import functools

import jax
import jax.numpy as jnp
from jax.experimental import pallas as pl
from jax.experimental.pallas import tpu as pltpu


def _round_up(x, m):
    return ((x + m - 1) // m) * m


def _default_vmem_limit_bytes():
    # ~3/4 of physical VMEM, capped at 96 MiB: 96 MiB on v5e/v6e (128 MiB phys),
    # 48 MiB on v7x (64 MiB phys). Falls back to 64 MiB if the query fails.
    try:
        cap = int(getattr(pltpu.get_tpu_info(), "vmem_capacity_bytes"))
        return int(min(96 * 1024 * 1024, max(32 * 1024 * 1024, (cap * 3) // 4)))
    except Exception:
        return 64 * 1024 * 1024


# ----------------------------------------------------------------------------
# Parameter fold (do ONCE at parameter-load time, not per call).
# ----------------------------------------------------------------------------
def fold_decoder_init_params(w_init_h, b_init_h, w_init_c, b_init_c,
                             w_f_beta, b_f_beta, *, matmul_dtype=jnp.float32):
    """Fold init_h / init_c / f_beta into one lane-dense padded matmul.

    Returns (w_fold, b_fold, D, E, out_w) with
      w_fold: (E, out_w)  = [W_h | W_c | W_h @ W_fb | 0-pad]   (matmul_dtype)
      b_fold: (1, out_w)  = [b_h | b_c | b_h @ W_fb + b_fb | 0-pad]  (f32)
      out_w  = round_up(2D + E, 128)
    """
    E, D = w_init_h.shape
    raw_w = 2 * D + E
    out_w = _round_up(raw_w, 128)

    w_gate = jnp.dot(w_init_h, w_f_beta)                  # (E, E)
    b_gate = jnp.dot(b_init_h, w_f_beta) + b_f_beta       # (E,)

    w_fold = jnp.concatenate([w_init_h, w_init_c, w_gate], axis=1)   # (E, 2D+E)
    b_fold = jnp.concatenate([b_init_h, b_init_c, b_gate])           # (2D+E,)
    if out_w > raw_w:
        w_fold = jnp.pad(w_fold, ((0, 0), (0, out_w - raw_w)))
        b_fold = jnp.pad(b_fold, (0, out_w - raw_w))

    w_fold = w_fold.astype(matmul_dtype)
    b_fold = b_fold.reshape(1, out_w).astype(jnp.float32)
    return w_fold, b_fold, D, E, out_w


# ----------------------------------------------------------------------------
# Fused kernel: sublane-sum over num_pixels -> ONE MXU matmul with the folded
# padded weight -> sigmoid on the gate lanes (lane-mask select) -> one
# unmasked lane-dense store of the slab [h | c | gate | pad].
# ----------------------------------------------------------------------------
def _fused_decoder_init_kernel(enc_ref, w_ref, b_ref, out_ref, *, inv_p, gate_start):
    enc = enc_ref[...]                                   # (tb, P, E) f32
    s = jnp.sum(enc, axis=1)                             # (tb, E) sublane reduce (XLU)
    s = s.astype(w_ref.dtype)                            # bf16 path for large E/D

    # (sum @ W_fold) * (1/P) + b_fold  ==  mean @ W_fold + b_fold  (scalar commutes)
    pre = (
        jnp.dot(s, w_ref[...], preferred_element_type=jnp.float32) * inv_p
        + b_ref[...]
    )                                                    # (tb, out_w) f32

    # sigmoid only on lanes >= 2D (gate + pad lanes; pad lanes are discarded by
    # the wrapper). One EUP push + one VPU select; no lane concat/relayout.
    lane = jax.lax.broadcasted_iota(jnp.int32, pre.shape, 1)
    out_ref[...] = jnp.where(lane >= gate_start, jax.nn.sigmoid(pre), pre)


# ----------------------------------------------------------------------------
# Wrappers
# ----------------------------------------------------------------------------
def decoder_init_slab(encoder_out, w_fold, b_fold, decoder_dim,
                      *, block_b=None, vmem_limit_bytes=None):
    """Returns the lane-dense slab (B, out_w) = [h | c | gate | pad]."""
    B, P, E = encoder_out.shape
    D = decoder_dim
    out_w = w_fold.shape[1]

    # Batch tile: as large as reasonable; ragged tail handled by pl.cdiv grid
    # (out-of-bounds rows are masked on store; rows are independent).
    tb = block_b if block_b is not None else min(B, 128)
    grid = (pl.cdiv(B, tb),)

    kernel = functools.partial(
        _fused_decoder_init_kernel, inv_p=1.0 / float(P), gate_start=2 * D
    )

    cost = pl.CostEstimate(
        flops=B * P * E + 2 * B * E * out_w + 3 * B * out_w,
        transcendentals=B * out_w,
        bytes_accessed=(
            encoder_out.dtype.itemsize * B * P * E
            + w_fold.dtype.itemsize * E * out_w
            + 4 * out_w
            + 4 * B * out_w
        ),
    )

    if vmem_limit_bytes is None:
        vmem_limit_bytes = _default_vmem_limit_bytes()

    return pl.pallas_call(
        kernel,
        out_shape=jax.ShapeDtypeStruct((B, out_w), jnp.float32),
        grid=grid,
        in_specs=[
            # Only the large operand is really tiled; weights/bias use a
            # constant block index so they are brought into VMEM once.
            pl.BlockSpec((tb, P, E), lambda i: (i, 0, 0)),
            pl.BlockSpec((E, out_w), lambda i: (0, 0)),
            pl.BlockSpec((1, out_w), lambda i: (0, 0)),
        ],
        out_specs=pl.BlockSpec((tb, out_w), lambda i: (i, 0)),
        compiler_params=pltpu.CompilerParams(
            dimension_semantics=("parallel",),   # batch tiles shard across TCs (v7x)
            vmem_limit_bytes=vmem_limit_bytes,
        ),
        cost_estimate=cost,
    )(encoder_out, w_fold, b_fold)


def decoder_init_and_gate(encoder_out, folded_params, *, block_b=None):
    """Fused init_hidden_state + f_beta gate. Returns (h, c, gate)."""
    w_fold, b_fold, D, E, _ = folded_params
    slab = decoder_init_slab(encoder_out, w_fold, b_fold, D, block_b=block_b)
    return slab[:, :D], slab[:, D:2 * D], slab[:, 2 * D:2 * D + E]


def init_hidden_state(encoder_out, folded_params, **kw):
    """Mirrors BaseDecoderWAttention.init_hidden_state -> (h, c)."""
    h, c, _ = decoder_init_and_gate(encoder_out, folded_params, **kw)
    return h, c


# TODO(synk): forward() is @abstractmethod (body is `pass`) in the reference
# module, so the embedding / attention / LSTMCell / dropout / scheduled-sampling
# decode loop is never executed by this class; only init_hidden_state and the
# f_beta+sigmoid gate are concrete compute and are implemented above.


if __name__ == "__main__":
    # Small, deterministic config consistent with the module's __init__.
    batch = 16
    num_pixels = 16       # e.g. flattened 4x4 encoder feature map
    encoder_dim = 32
    decoder_dim = 32
    attention_dim = 32    # declared but unused by the concrete compute here
    embed_dim = 32        # declared but unused (embedding never run by forward)
    vocab_size = 40       # declared but unused

    key = jax.random.PRNGKey(0)
    k_enc, k_wh, k_bh, k_wc, k_bc, k_wf, k_bf = jax.random.split(key, 7)

    encoder_out = jax.random.normal(
        k_enc, (batch, num_pixels, encoder_dim), dtype=jnp.float32
    )

    # Deterministic parameter init (uniform, roughly matching nn.Linear scale).
    def uinit(k, shape, fan_in):
        bound = 1.0 / jnp.sqrt(fan_in)
        return jax.random.uniform(k, shape, jnp.float32, -bound, bound)

    # init_h / init_c: Linear(encoder_dim -> decoder_dim), stored as (E, D)
    w_init_h = uinit(k_wh, (encoder_dim, decoder_dim), encoder_dim)
    b_init_h = uinit(k_bh, (decoder_dim,), encoder_dim)
    w_init_c = uinit(k_wc, (encoder_dim, decoder_dim), encoder_dim)
    b_init_c = uinit(k_bc, (decoder_dim,), encoder_dim)
    # f_beta: Linear(decoder_dim -> encoder_dim), stored as (D, E)
    w_f_beta = uinit(k_wf, (decoder_dim, encoder_dim), decoder_dim)
    b_f_beta = uinit(k_bf, (encoder_dim,), decoder_dim)

    # Fold + pad weights ONCE (parameter-load time), then run the fused kernel.
    folded = fold_decoder_init_params(
        w_init_h, b_init_h, w_init_c, b_init_c, w_f_beta, b_f_beta
    )
    folded = jax.block_until_ready(folded)

    # Single grid step at B=16 (tb = min(B, 128) = 16).
    h, c, gate = decoder_init_and_gate(encoder_out, folded)
    jax.block_until_ready((h, c, gate))

    # Reference check in plain JAX (mirrors the PyTorch semantics exactly).
    mean_ref = jnp.mean(encoder_out, axis=1)
    h_ref = mean_ref @ w_init_h + b_init_h
    c_ref = mean_ref @ w_init_c + b_init_c
    gate_ref = jax.nn.sigmoid(h_ref @ w_f_beta + b_f_beta)

    assert jnp.allclose(h, h_ref, atol=1e-4, rtol=1e-4), "h mismatch"
    assert jnp.allclose(c, c_ref, atol=1e-4, rtol=1e-4), "c mismatch"
    assert jnp.allclose(gate, gate_ref, atol=1e-4, rtol=1e-4), "gate mismatch"

    print("KERNEL_OK")
</pallas_src>

<mosaic_0001>
module attributes {stable_mosaic.version = 11 : i64} {
  func.func @_fused_decoder_init_kernel(%arg0: i32, %arg1: memref<16x16x32xf32, #tpu.memory_space<vmem>>, %arg2: memref<32x128xf32, #tpu.memory_space<vmem>>, %arg3: memref<1x128xf32, #tpu.memory_space<vmem>>, %arg4: memref<16x128xf32, #tpu.memory_space<vmem>>) attributes {dimension_semantics = [#tpu.dimension_semantics<parallel>], iteration_bounds = array<i64: 1>, scalar_prefetch = 0 : i64, scratch_operands = 0 : i64, tpu.core_type = #tpu.core_type<tc>, window_params = [{transform_indices = @transform_0, window_bounds = array<i64: 16, 16, 32>}, {pipeline_mode = #tpu.pipeline_mode<synchronous>, transform_indices = @transform_1, window_bounds = array<i64: 32, 128>}, {pipeline_mode = #tpu.pipeline_mode<synchronous>, transform_indices = @transform_2, window_bounds = array<i64: 1, 128>}, {transform_indices = @transform_3, window_bounds = array<i64: 16, 128>}]} {
    %c0 = arith.constant 0 : index
    %c0_0 = arith.constant 0 : index
    %c0_1 = arith.constant 0 : index
    %0 = vector.load %arg1[%c0, %c0_0, %c0_1] : memref<16x16x32xf32, #tpu.memory_space<vmem>>, vector<16x16x32xf32>
    %cst = arith.constant dense<0.000000e+00> : vector<16x32xf32>
    %1 = vector.multi_reduction <add>, %0, %cst [1] : vector<16x16x32xf32> to vector<16x32xf32>
    %c0_2 = arith.constant 0 : index
    %c0_3 = arith.constant 0 : index
    %2 = vector.load %arg2[%c0_2, %c0_3] : memref<32x128xf32, #tpu.memory_space<vmem>>, vector<32x128xf32>
    %cst_4 = arith.constant dense<0.000000e+00> : vector<16x128xf32>
    %3 = tpu.matmul %1, %2, %cst_4 {dimension_numbers = #tpu.dot_dimension_numbers<[1], [0], [0], [1], [0, 0, 1, 1], [], []>} : vector<16x32xf32>, vector<32x128xf32>, vector<16x128xf32> -> vector<16x128xf32>
    %cst_5 = arith.constant 6.250000e-02 : f32
    %4 = vector.broadcast %cst_5 : f32 to vector<16x128xf32>
    %5 = arith.mulf %3, %4 : vector<16x128xf32>
    %c0_6 = arith.constant 0 : index
    %c0_7 = arith.constant 0 : index
    %6 = vector.load %arg3[%c0_6, %c0_7] : memref<1x128xf32, #tpu.memory_space<vmem>>, vector<1x128xf32>
    %7 = vector.broadcast %6 : vector<1x128xf32> to vector<16x128xf32>
    %8 = arith.addf %5, %7 : vector<16x128xf32>
    %9 = tpu.iota {dimensions = array<i32: 1>} : vector<16x128xi32>
    %c64_i32 = arith.constant 64 : i32
    %10 = vector.broadcast %c64_i32 : i32 to vector<16x128xi32>
    %11 = arith.cmpi sge, %9, %10 : vector<16x128xi32>
    %12 = arith.negf %8 : vector<16x128xf32>
    %13 = math.exp %12 : vector<16x128xf32>
    %cst_8 = arith.constant 1.000000e+00 : f32
    %14 = vector.broadcast %cst_8 : f32 to vector<16x128xf32>
    %15 = arith.addf %14, %13 : vector<16x128xf32>
    %16 = arith.divf %14, %15 : vector<16x128xf32>
    %17 = arith.select %11, %16, %8 : vector<16x128xi1>, vector<16x128xf32>
    %c0_9 = arith.constant 0 : index
    %c0_10 = arith.constant 0 : index
    %18 = vector.load %arg4[%c0_9, %c0_10] : memref<16x128xf32, #tpu.memory_space<vmem>>, vector<16x128xf32>
    tpu.vector_store %arg4[%c0_9, %c0_10], %17 {strides = array<i32>} : memref<16x128xf32, #tpu.memory_space<vmem>>, vector<16x128xf32>,
    return
  }
  func.func @transform_0(%arg0: i32) -> (i32, i32, i32) {
    %c0_i32 = arith.constant 0 : i32
    %c0_i32_0 = arith.constant 0 : i32
    %c0_i32_1 = arith.constant 0 : i32
    return %arg0, %c0_i32, %c0_i32_0 : i32, i32, i32
  }
  func.func @transform_1(%arg0: i32) -> (i32, i32) {
    %c0_i32 = arith.constant 0 : i32
    %c0_i32_0 = arith.constant 0 : i32
    %c0_i32_1 = arith.constant 0 : i32
    return %c0_i32, %c0_i32_0 : i32, i32
  }
  func.func @transform_2(%arg0: i32) -> (i32, i32) {
    %c0_i32 = arith.constant 0 : i32
    %c0_i32_0 = arith.constant 0 : i32
    %c0_i32_1 = arith.constant 0 : i32
    return %c0_i32, %c0_i32_0 : i32, i32
  }
  func.func @transform_3(%arg0: i32) -> (i32, i32) {
    %c0_i32 = arith.constant 0 : i32
    %c0_i32_0 = arith.constant 0 : i32
    return %arg0, %c0_i32 : i32, i32
  }
}

</mosaic_0001>

<llo_original>
// kernel: tpu_custom_call.1
$region0: #{tpu_custom_call.1}
  #allocation0 [shape = 'u32[]', space=smem, size = 0x4, offset = 0x4, fixed_abs, tag = 'smem constant byte address 0x4 - core index']
  #allocation1 [shape = 'u32[144,128]{1,0:T(1,128)}', space=vmem, size = 0x12000, scoped, tag = 'internal scratch']
  %s0 = inlined_call_operand.hbm [shape: f32[16,16,32], index: 0, kind: input, shape index: {}]
  %s1 = inlined_call_operand.hbm [shape: f32[32,128], index: 1, kind: input, shape index: {}]
  %s2 = inlined_call_operand.hbm [shape: f32[1,128], index: 2, kind: input, shape index: {}]
  %s3 = inlined_call_operand.hbm [shape: f32[16,128], index: 3, kind: output, shape index: {}]
  %s4 = sld [smem:[#allocation0]]
  $region34: #{tpu_custom_call.1} parent=0
    _
  %s6 = ssub.s32 1, %s4
  %s7 = scalar_select 0, %s6, %s4
  $region1: #{tpu_custom_call.1} parent=0
    #allocation2 [shape = 'u8[131072]{0}', space=vmem, size = 0x20000, scoped, tag = 'input window, operand 0, single buffered']
    #allocation3 [shape = 's32[1]{0}', space=sflag, size = 0x4, scoped, tag = 'scoped memory for tpu_custom_call.1']
    #allocation4 [shape = 's32[1]{0}', space=sflag, size = 0x4, scoped, tag = 'scoped memory for tpu_custom_call.1']
    #allocation5 [shape = 'u8[16384]{0}', space=vmem, size = 0x4000, scoped, tag = 'input window, operand 1, single buffered']
    #allocation6 [shape = 's32[1]{0}', space=sflag, size = 0x4, scoped, tag = 'scoped memory for tpu_custom_call.1']
    #allocation7 [shape = 'u8[512]{0}', space=vmem, size = 0x400, scoped, tag = 'input window, operand 2, single buffered']
    #allocation8 [shape = 'u8[8192]{0}', space=vmem, size = 0x2000, scoped, tag = 'output window, operand 0, single buffered']
    %8 = vsyncpa [#allocation3], 0
    %9 = vsyncpa [#allocation6], 0
    %10 = vsyncpa [#allocation4], 0
    // Predicated region
    $region2: #{tpu_custom_call.1} parent=1 // pred_check
      _
    $region3: #{tpu_custom_call.1} parent=1 // pred_check_branch
      %12 = sbr.rel (0) target = $region5
    $region4: #{tpu_custom_call.1} parent=1 // pred_region
      %s14 = ssub.s32 4096, 4096
      %15 = vsyncadd [#allocation3], %s14
      %s16 = sshll.u32 [#allocation2], 4
      %s17 = int_to_ptr.vmem [resolvable:$true] %s16
      %22 = dma.hbm_to_vmem [thread:$0]  %s0, 4096, %s17, [#allocation3], 128, 128, 8
    $region5: #{tpu_custom_call.1} parent=1 // pred_fallthru
      _
    // Predicated region
    $region6: #{tpu_custom_call.1} parent=1 // pred_check
      _
    $region7: #{tpu_custom_call.1} parent=1 // pred_check_branch
      %24 = sbr.rel (0) target = $region9
    $region8: #{tpu_custom_call.1} parent=1 // pred_region
      %s26 = ssub.s32 512, 512
      %27 = vsyncadd [#allocation6], %s26
      %s28 = sshll.u32 [#allocation5], 4
      %s29 = int_to_ptr.vmem [resolvable:$true] %s28
      %34 = dma.hbm_to_vmem [thread:$0]  %s1, 512, %s29, [#allocation6], 128, 128, 8
    $region9: #{tpu_custom_call.1} parent=1 // pred_fallthru
      _
    // Predicated region
    $region10: #{tpu_custom_call.1} parent=1 // pred_check
      _
    $region11: #{tpu_custom_call.1} parent=1 // pred_check_branch
      %36 = sbr.rel (0) target = $region13
    $region12: #{tpu_custom_call.1} parent=1 // pred_region
      %s38 = ssub.s32 16, 16
      %39 = vsyncadd [#allocation6], %s38
      %s41 = sshll.u32 [#allocation7], 4
      %s42 = int_to_ptr.vmem [resolvable:$true] %s41
      %44 = dma.hbm_to_vmem [thread:$0]  %s2, 16, %s42, [#allocation6]
    $region13: #{tpu_custom_call.1} parent=1 // pred_fallthru
      _
    // Predicated region
    $region14: #{tpu_custom_call.1} parent=1 // pred_check
      _
    $region15: #{tpu_custom_call.1} parent=1 // pred_check_branch
      %46 = sbr.rel (0) target = $region17
    $region16: #{tpu_custom_call.1} parent=1 // pred_region
      %47 = dma.done [#allocation3], 4096
    $region17: #{tpu_custom_call.1} parent=1 // pred_fallthru
      _
    // Predicated region
    $region18: #{tpu_custom_call.1} parent=1 // pred_check
      _
    $region19: #{tpu_custom_call.1} parent=1 // pred_check_branch
      %49 = sbr.rel (0) target = $region21
    $region20: #{tpu_custom_call.1} parent=1 // pred_region
      %50 = dma.done [#allocation6], 512
    $region21: #{tpu_custom_call.1} parent=1 // pred_fallthru
      _
    // Predicated region
    $region22: #{tpu_custom_call.1} parent=1 // pred_check
      _
    $region23: #{tpu_custom_call.1} parent=1 // pred_check_branch
      %52 = sbr.rel (0) target = $region25
    $region24: #{tpu_custom_call.1} parent=1 // pred_region
      %53 = dma.done [#allocation6], 16
    $region25: #{tpu_custom_call.1} parent=1 // pred_fallthru
      _
    %v54 = vld [vmem:[#allocation2] sm:$0xff]
    %v55 = vld [vmem:[#allocation2 + $0x8] sm:$0xff]
    %v56 = vld [vmem:[#allocation2 + $0x10] sm:$0xff]
    %v57 = vld [vmem:[#allocation2 + $0x18] sm:$0xff]
    %v58 = vld [vmem:[#allocation2 + $0x20] sm:$0xff]
    %v59 = vld [vmem:[#allocation2 + $0x28] sm:$0xff]
    %v60 = vld [vmem:[#allocation2 + $0x30] sm:$0xff]
    %v61 = vld [vmem:[#allocation2 + $0x38] sm:$0xff]
    %v62 = vld [vmem:[#allocation2 + $0x40] sm:$0xff]
    %v63 = vld [vmem:[#allocation2 + $0x48] sm:$0xff]
    %v64 = vld [vmem:[#allocation2 + $0x50] sm:$0xff]
    %v65 = vld [vmem:[#allocation2 + $0x58] sm:$0xff]
    %v66 = vld [vmem:[#allocation2 + $0x60] sm:$0xff]
    %v67 = vld [vmem:[#allocation2 + $0x68] sm:$0xff]
    %v68 = vld [vmem:[#allocation2 + $0x70] sm:$0xff]
    %v69 = vld [vmem:[#allocation2 + $0x78] sm:$0xff]
    %v70 = vld [vmem:[#allocation2 + $0x80] sm:$0xff]
    %v71 = vld [vmem:[#allocation2 + $0x88] sm:$0xff]
    %v72 = vld [vmem:[#allocation2 + $0x90] sm:$0xff]
    %v73 = vld [vmem:[#allocation2 + $0x98] sm:$0xff]
    %v74 = vld [vmem:[#allocation2 + $0xa0] sm:$0xff]
    %v75 = vld [vmem:[#allocation2 + $0xa8] sm:$0xff]
    %v76 = vld [vmem:[#allocation2 + $0xb0] sm:$0xff]
    %v77 = vld [vmem:[#allocation2 + $0xb8] sm:$0xff]
    %v78 = vld [vmem:[#allocation2 + $0xc0] sm:$0xff]
    %v79 = vld [vmem:[#allocation2 + $0xc8] sm:$0xff]
    %v80 = vld [vmem:[#allocation2 + $0xd0] sm:$0xff]
    %v81 = vld [vmem:[#allocation2 + $0xd8] sm:$0xff]
    %v82 = vld [vmem:[#allocation2 + $0xe0] sm:$0xff]
    %v83 = vld [vmem:[#allocation2 + $0xe8] sm:$0xff]
    %v84 = vld [vmem:[#allocation2 + $0xf0] sm:$0xff]
    %v85 = vld [vmem:[#allocation2 + $0xf8] sm:$0xff]
    %vm86 = vcmask 261120
    %v87 = vsel %vm86, %v54, 0.0
    %v88 = vsel %vm86, %v55, 0.0
    %v89 = vadd.f32 %v87, %v88
    %v90 = vrot.slane %v89, 4
    %v91 = vadd.f32 %v89, %v90
    %v92 = vrot.slane %v91, 2
    %v93 = vadd.f32 %v91, %v92
    %v94 = vrot.slane %v93, 1
    %v95 = vadd.f32 %v93, %v94
    %v96 = vsel %vm86, %v56, 0.0
    %v97 = vsel %vm86, %v57, 0.0
    %v98 = vadd.f32 %v96, %v97
    %v99 = vrot.slane %v98, 4
    %v100 = vadd.f32 %v98, %v99
    %v101 = vrot.slane %v100, 2
    %v102 = vadd.f32 %v100, %v101
    %v103 = vrot.slane %v102, 1
    %v104 = vadd.f32 %v102, %v103
    %v105 = vsel %vm86, %v58, 0.0
    %v106 = vsel %vm86, %v59, 0.0
    %v107 = vadd.f32 %v105, %v106
    %v108 = vrot.slane %v107, 4
    %v109 = vadd.f32 %v107, %v108
    %v110 = vrot.slane %v109, 2
    %v111 = vadd.f32 %v109, %v110
    %v112 = vrot.slane %v111, 1
    %v113 = vadd.f32 %v111, %v112
    %v114 = vsel %vm86, %v60, 0.0
    %v115 = vsel %vm86, %v61, 0.0
    %v116 = vadd.f32 %v114, %v115
    %v117 = vrot.slane %v116, 4
    %v118 = vadd.f32 %v116, %v117
    %v119 = vrot.slane %v118, 2
    %v120 = vadd.f32 %v118, %v119
    %v121 = vrot.slane %v120, 1
    %v122 = vadd.f32 %v120, %v121
    %v123 = vsel %vm86, %v62, 0.0
    %v124 = vsel %vm86, %v63, 0.0
    %v125 = vadd.f32 %v123, %v124
    %v126 = vrot.slane %v125, 4
    %v127 = vadd.f32 %v125, %v126
    %v128 = vrot.slane %v127, 2
    %v129 = vadd.f32 %v127, %v128
    %v130 = vrot.slane %v129, 1
    %v131 = vadd.f32 %v129, %v130
    %v132 = vsel %vm86, %v64, 0.0
    %v133 = vsel %vm86, %v65, 0.0
    %v134 = vadd.f32 %v132, %v133
    %v135 = vrot.slane %v134, 4
    %v136 = vadd.f32 %v134, %v135
    %v137 = vrot.slane %v136, 2
    %v138 = vadd.f32 %v136, %v137
    %v139 = vrot.slane %v138, 1
    %v140 = vadd.f32 %v138, %v139
    %v141 = vsel %vm86, %v66, 0.0
    %v142 = vsel %vm86, %v67, 0.0
    %v143 = vadd.f32 %v141, %v142
    %v144 = vrot.slane %v143, 4
    %v145 = vadd.f32 %v143, %v144
    %v146 = vrot.slane %v145, 2
    %v147 = vadd.f32 %v145, %v146
    %v148 = vrot.slane %v147, 1
    %v149 = vadd.f32 %v147, %v148
    %v150 = vsel %vm86, %v68, 0.0
    %v151 = vsel %vm86, %v69, 0.0
    %v152 = vadd.f32 %v150, %v151
    %v153 = vrot.slane %v152, 4
    %v154 = vadd.f32 %v152, %v153
    %v155 = vrot.slane %v154, 2
    %v156 = vadd.f32 %v154, %v155
    %v157 = vrot.slane %v156, 1
    %v158 = vadd.f32 %v156, %v157
    %v159 = vsel %vm86, %v70, 0.0
    %v160 = vsel %vm86, %v71, 0.0
    %v161 = vadd.f32 %v159, %v160
    %v162 = vrot.slane %v161, 4
    %v163 = vadd.f32 %v161, %v162
    %v164 = vrot.slane %v163, 2
    %v165 = vadd.f32 %v163, %v164
    %v166 = vrot.slane %v165, 1
    %v167 = vadd.f32 %v165, %v166
    %v168 = vsel %vm86, %v72, 0.0
    %v169 = vsel %vm86, %v73, 0.0
    %v170 = vadd.f32 %v168, %v169
    %v171 = vrot.slane %v170, 4
    %v172 = vadd.f32 %v170, %v171
    %v173 = vrot.slane %v172, 2
    %v174 = vadd.f32 %v172, %v173
    %v175 = vrot.slane %v174, 1
    %v176 = vadd.f32 %v174, %v175
    %v177 = vsel %vm86, %v74, 0.0
    %v178 = vsel %vm86, %v75, 0.0
    %v179 = vadd.f32 %v177, %v178
    %v180 = vrot.slane %v179, 4
    %v181 = vadd.f32 %v179, %v180
    %v182 = vrot.slane %v181, 2
    %v183 = vadd.f32 %v181, %v182
    %v184 = vrot.slane %v183, 1
    %v185 = vadd.f32 %v183, %v184
    %v186 = vsel %vm86, %v76, 0.0
    %v187 = vsel %vm86, %v77, 0.0
    %v188 = vadd.f32 %v186, %v187
    %v189 = vrot.slane %v188, 4
    %v190 = vadd.f32 %v188, %v189
    %v191 = vrot.slane %v190, 2
    %v192 = vadd.f32 %v190, %v191
    %v193 = vrot.slane %v192, 1
    %v194 = vadd.f32 %v192, %v193
    %v195 = vsel %vm86, %v78, 0.0
    %v196 = vsel %vm86, %v79, 0.0
    %v197 = vadd.f32 %v195, %v196
    %v198 = vrot.slane %v197, 4
    %v199 = vadd.f32 %v197, %v198
    %v200 = vrot.slane %v199, 2
    %v201 = vadd.f32 %v199, %v200
    %v202 = vrot.slane %v201, 1
    %v203 = vadd.f32 %v201, %v202
    %v204 = vsel %vm86, %v80, 0.0
    %v205 = vsel %vm86, %v81, 0.0
    %v206 = vadd.f32 %v204, %v205
    %v207 = vrot.slane %v206, 4
    %v208 = vadd.f32 %v206, %v207
    %v209 = vrot.slane %v208, 2
    %v210 = vadd.f32 %v208, %v209
    %v211 = vrot.slane %v210, 1
    %v212 = vadd.f32 %v210, %v211
    %v213 = vsel %vm86, %v82, 0.0
    %v214 = vsel %vm86, %v83, 0.0
    %v215 = vadd.f32 %v213, %v214
    %v216 = vrot.slane %v215, 4
    %v217 = vadd.f32 %v215, %v216
    %v218 = vrot.slane %v217, 2
    %v219 = vadd.f32 %v217, %v218
    %v220 = vrot.slane %v219, 1
    %v221 = vadd.f32 %v219, %v220
    %v222 = vsel %vm86, %v84, 0.0
    %v223 = vsel %vm86, %v85, 0.0
    %v224 = vadd.f32 %v222, %v223
    %v225 = vrot.slane %v224, 4
    %v226 = vadd.f32 %v224, %v225
    %v227 = vrot.slane %v226, 2
    %v228 = vadd.f32 %v226, %v227
    %v229 = vrot.slane %v228, 1
    %v230 = vadd.f32 %v228, %v229
    %v231 = vld [vmem:[#allocation5] sm:$0xff]
    %v232 = vld [vmem:[#allocation5 + $0x8] sm:$0xff]
    %v233 = vld [vmem:[#allocation5 + $0x10] sm:$0xff]
    %v234 = vld [vmem:[#allocation5 + $0x18] sm:$0xff]
    %vm251 = vcmask 1041409
    %v252 = vsel %vm251, %v104, %v95
    %vm253 = vcmask 1042434
    %v254 = vsel %vm253, %v113, %v252
    %vm255 = vcmask 1043459
    %v256 = vsel %vm255, %v122, %v254
    %vm257 = vcmask 1044484
    %v258 = vsel %vm257, %v131, %v256
    %vm259 = vcmask 1045509
    %v260 = vsel %vm259, %v140, %v258
    %vm261 = vcmask 1046534
    %v262 = vsel %vm261, %v149, %v260
    %vm263 = vcmask 1047559
    %v264 = vsel %vm263, %v158, %v262
    %v265 = vsel %vm251, %v176, %v167
    %v266 = vsel %vm253, %v185, %v265
    %v267 = vsel %vm255, %v194, %v266
    %v268 = vsel %vm257, %v203, %v267
    %v269 = vsel %vm259, %v212, %v268
    %v270 = vsel %vm261, %v221, %v269
    %v271 = vsel %vm263, %v230, %v270
    %v272 = vsel %vm86, %v264, 0
    %v274 = vsel %vm86, %v271, 0
    %276 = vmatprep.subr.mxu0 0.0
    %277 = vmatpush1.msra.mxu0 %v231
    %278 = vmatprep.subr.mxu0 0.0
    %279 = vmatpush1.msra.mxu0 %v232
    %280 = vmatprep.subr.mxu0 0.0
    %281 = vmatpush1.msra.mxu0 %v233
    %282 = vmatprep.subr.mxu0 0.0
    %283 = vmatpush1.msra.mxu0 %v234
    %284 = vmatprep.subr.mxu0 0.0
    %285 = vmatpush1.msra.mxu0 0.0
    %286 = vmatprep.subr.mxu0 0.0
    %287 = vmatpush1.msra.mxu0 0.0
    %288 = vmatprep.subr.mxu0 0.0
    %289 = vmatpush1.msra.mxu0 0.0
    %290 = vmatprep.subr.mxu0 0.0
    %291 = vmatpush1.msra.mxu0 0.0
    %292 = vmatprep.subr.mxu0 0.0
    %293 = vmatpush1.msra.mxu0 0.0
    %294 = vmatprep.subr.mxu0 0.0
    %295 = vmatpush1.msra.mxu0 0.0
    %296 = vmatprep.subr.mxu0 0.0
    %297 = vmatpush1.msra.mxu0 0.0
    %298 = vmatprep.subr.mxu0 0.0
    %299 = vmatpush1.msra.mxu0 0.0
    %300 = vmatprep.subr.mxu0 0.0
    %301 = vmatpush1.msra.mxu0 0.0
    %302 = vmatprep.subr.mxu0 0.0
    %303 = vmatpush1.msra.mxu0 0.0
    %304 = vmatprep.subr.mxu0 0.0
    %305 = vmatpush1.msra.mxu0 0.0
    %306 = vmatprep.subr.mxu0 0.0
    %307 = vmatpush1.msra.mxu0 0.0
    %308 = vmatprep.subr.mxu0 0.0
    %309 = vmatpush1.msra.mxu0 0.0
    %310 = vmatprep.subr.mxu0 0.0
    %311 = vmatpush1.msra.mxu0 0.0
    %312 = vmatprep.subr.mxu0 0.0
    %313 = vmatpush1.msra.mxu0 0.0
    %314 = vmatprep.subr.mxu0 0.0
    %315 = vmatpush1.msra.mxu0 0.0
    %316 = vmatprep.subr.mxu0 0.0
    %317 = vmatpush1.msra.mxu0 0.0
    %318 = vmatprep.subr.mxu0 0.0
    %319 = vmatpush1.msra.mxu0 0.0
    %320 = vmatprep.subr.mxu0 0.0
    %321 = vmatpush1.msra.mxu0 0.0
    %322 = vmatprep.subr.mxu0 0.0
    %323 = vmatpush1.msra.mxu0 0.0
    %324 = vmatprep.subr.mxu0 0.0
    %325 = vmatpush1.msra.mxu0 0.0
    %326 = vmatprep.subr.mxu0 0.0
    %327 = vmatpush1.msra.mxu0 0.0
    %328 = vmatprep.subr.mxu0 0.0
    %329 = vmatpush1.msra.mxu0 0.0
    %330 = vmatprep.subr.mxu0 0.0
    %331 = vmatpush1.msra.mxu0 0.0
    %332 = vmatprep.subr.mxu0 0.0
    %333 = vmatpush1.msra.mxu0 0.0
    %334 = vmatprep.subr.mxu0 0.0
    %335 = vmatpush1.msra.mxu0 0.0
    %336 = vmatprep.subr.mxu0 0.0
    %337 = vmatpush1.msra.mxu0 0.0
    %338 = vmatprep.subr.mxu0 0.0
    %339 = vmatpush1.msra.mxu0 0.0
    %340 = vmatprep.mubr.f32.mxu0 0.0
    %341 = vmatmul.mubr.f32.gmra.mrb[0].mxu0 %v272
    %v342 = vpop.f32.mrb[0].mxu0
    %v343 = vadd.f32 0.0, %v342
    %v344 = vpop.f32.mrb[0].mxu0
    %345 = vmatprep.mubr.f32.mxu0 0.0
    %346 = vmatmul.mubr.f32.gmra.mrb[0].mxu0 %v274
    %v347 = vpop.f32.mrb[0].mxu0
    %v348 = vadd.f32 0.0, %v347
    %v349 = vpop.f32.mrb[0].mxu0
    %350 = vdwg.mxu0
    %v351 = vmul.f32 %v343, 0.0625
    %v352 = vmul.f32 %v348, 0.0625
    %v353 = vld [vmem:[#allocation7] sm:$0x1]
    %v355 = vlaneseq
    %v356 = vshrl.u32 %v355, 7
    %v357 = vsub.s32 0, %v356
    %v358 = vrot.slane %v353, %v357
    %v360 = vadd.f32 %v351, %v358
    %v361 = vadd.f32 %v352, %v358
    %v362 = vlaneseq
    %v363 = vand.u32 %v362, 127
    %vm364 = vcmp.ge.s32.totalorder %v363, 64
    %v365 = vxor.u32 %v360, 2147483648
    %v366 = vxor.u32 %v361, 2147483648
    %v367 = vmul.f32 %v365, 1.442695
    %v368 = vpow.pop %v367
    %v369 = vmul.f32 %v366, 1.442695
    %v370 = vpow.pop %v369
    %v371 = vadd.f32 %v368, 1.0
    %v372 = vadd.f32 %v370, 1.0
    %v373 = vrcp.pop %v371
    %v374 = vmul.f32 1.0, %v373
    %v375 = vrcp.pop %v372
    %v376 = vmul.f32 1.0, %v375
    %v377 = vsel %vm364, %v374, %v360
    %v378 = vsel %vm364, %v376, %v361
    %379 = vst [vmem:[#allocation8] sm:$0xff] %v377
    %380 = vst [vmem:[#allocation8 + $0x8] sm:$0xff] %v378
    // Predicated region
    $region26: #{tpu_custom_call.1} parent=1 // pred_check
      _
    $region27: #{tpu_custom_call.1} parent=1 // pred_check_branch
      %382 = sbr.rel (0) target = $region29
    $region28: #{tpu_custom_call.1} parent=1 // pred_region
      %s384 = ssub.s32 256, 256
      %385 = vsyncadd [#allocation4], %s384
      %s386 = sshll.u32 [#allocation8], 4
      %s387 = int_to_ptr.vmem [resolvable:$true] %s386
      %392 = dma.vmem_to_hbm [thread:$0]  %s387, 256, %s3, [#allocation4], 128, 128, 8
    $region29: #{tpu_custom_call.1} parent=1 // pred_fallthru
      _
    // Predicated region
    $region30: #{tpu_custom_call.1} parent=1 // pred_check
      _
    $region31: #{tpu_custom_call.1} parent=1 // pred_check_branch
      %394 = sbr.rel (0) target = $region33
    $region32: #{tpu_custom_call.1} parent=1 // pred_region
      %395 = dma.done [#allocation4], 256
    $region33: #{tpu_custom_call.1} parent=1 // pred_fallthru
      _
    %396 = vsyncpa [#allocation3], 1
    %397 = vsyncpa [#allocation6], 1
    %398 = vsyncpa [#allocation4], 1

</llo_original>
